<compile_context>
chip_gen: v7x
topology: tpu7x:2x2x1
jax: 0.10.0
libtpu: 0.0.40
codegen_flags: <defaults>
</compile_context>

<pallas_src>
import jax
import jax.numpy as jnp
from jax.experimental import pallas as pl
from jax.experimental.pallas import tpu as pltpu


def _round_up(v, m):
    return ((v + m - 1) // m) * m


def linear_kernel(x_ref, w_ref, o_ref, acc_ref):
    # k-reduction accumulator pattern: init on first k step, store on last.
    @pl.when(pl.program_id(2) == 0)
    def _init():
        acc_ref[...] = jnp.zeros_like(acc_ref)

    acc_ref[...] += jnp.dot(
        x_ref[...], w_ref[...], preferred_element_type=jnp.float32
    )

    @pl.when(pl.program_id(2) == pl.num_programs(2) - 1)
    def _finalize():
        o_ref[...] = acc_ref[...].astype(o_ref.dtype)


def linear_forward(x, weight, *, tm=256, tn=256, tk=512):
    """Bias-free Linear: x [M, dim_in], weight [dim_out, dim_in] (PyTorch layout).

    Returns x @ weight.T as float32.  (bias=False matches the module default;
    a bias, if ever enabled, would be a trivial broadcast-add in the finalize.)
    """
    m, k = x.shape
    n = weight.shape[0]

    # Lane-dense padding: features -> multiples of 128 (full lanes, unmasked
    # stores), rows -> multiple of the row tile (itself a multiple of 8).
    k_pad = _round_up(k, 128)
    n_pad = _round_up(n, 128)
    tm = min(tm, _round_up(m, 8))
    tn = min(tn, n_pad)
    tk = min(tk, k_pad)
    m_pad = _round_up(m, tm)
    n_pad = _round_up(n_pad, tn)
    k_pad = _round_up(k_pad, tk)

    x_p = jnp.zeros((m_pad, k_pad), jnp.float32).at[:m, :k].set(
        x.astype(jnp.float32))
    # Pre-transpose to [dim_in, dim_out] so the kernel is a plain row-major GEMM.
    w_p = jnp.zeros((k_pad, n_pad), jnp.float32).at[:k, :n].set(
        weight.astype(jnp.float32).T)

    grid = (m_pad // tm, n_pad // tn, k_pad // tk)

    cost = pl.CostEstimate(
        flops=2 * m_pad * k_pad * n_pad,
        transcendentals=0,
        bytes_accessed=4 * (m_pad * k_pad + k_pad * n_pad + m_pad * n_pad),
    )

    out_p = pl.pallas_call(
        linear_kernel,
        out_shape=jax.ShapeDtypeStruct((m_pad, n_pad), jnp.float32),
        grid_spec=pltpu.PrefetchScalarGridSpec(
            num_scalar_prefetch=0,
            grid=grid,
            in_specs=[
                pl.BlockSpec((tm, tk), lambda i, j, kk: (i, kk)),   # x row/K tile
                pl.BlockSpec((tk, tn), lambda i, j, kk: (kk, j)),   # W K/col tile
            ],
            out_specs=pl.BlockSpec((tm, tn), lambda i, j, kk: (i, j)),
            scratch_shapes=[pltpu.VMEM((tm, tn), jnp.float32)],
        ),
        compiler_params=pltpu.CompilerParams(
            dimension_semantics=("parallel", "parallel", "arbitrary"),
        ),
        cost_estimate=cost,
    )(x_p, w_p)

    return out_p[:m, :n]


def apply_none_layer(node_feature, weight):
    """Mirrors `_None.forward`: apply the bias-free Linear to node features.
    (The graph-batch attribute plumbing of the PyTorch module is pure Python
    bookkeeping, so here we operate on the node_feature array directly.)"""
    return linear_forward(node_feature, weight)


if __name__ == "__main__":
    NUM_NODES, DIM_IN, DIM_OUT = 64, 32, 48

    key = jax.random.PRNGKey(0)
    kx, kw = jax.random.split(key, 2)

    # batch.node_feature: [num_nodes, dim_in]
    node_feature = jax.random.normal(kx, (NUM_NODES, DIM_IN), dtype=jnp.float32)

    # nn.Linear(dim_in, dim_out, bias=False).reset_parameters(): uniform(-1/sqrt(fan_in), +)
    bound = 1.0 / (DIM_IN ** 0.5)
    weight = jax.random.uniform(kw, (DIM_OUT, DIM_IN), jnp.float32, -bound, bound)

    out = jax.block_until_ready(apply_none_layer(node_feature, weight))

    ref = jax.block_until_ready(node_feature @ weight.T)
    assert out.shape == (NUM_NODES, DIM_OUT)
    assert jnp.allclose(out, ref, atol=2e-4, rtol=2e-4), "mismatch vs reference"

    print("KERNEL_OK")
</pallas_src>

<mosaic_0001>
module attributes {stable_mosaic.version = 11 : i64} {
  func.func @linear_kernel(%arg0: i32, %arg1: i32, %arg2: i32, %arg3: memref<64x128xf32, #tpu.memory_space<vmem>>, %arg4: memref<128x128xf32, #tpu.memory_space<vmem>>, %arg5: memref<64x128xf32, #tpu.memory_space<vmem>>, %arg6: memref<64x128xf32, #tpu.memory_space<vmem>>) attributes {dimension_semantics = [#tpu.dimension_semantics<parallel>, #tpu.dimension_semantics<parallel>, #tpu.dimension_semantics<arbitrary>], iteration_bounds = array<i64: 1, 1, 1>, scalar_prefetch = 0 : i64, scratch_operands = 1 : i64, tpu.core_type = #tpu.core_type<tc>, window_params = [{transform_indices = @transform_0, window_bounds = array<i64: 64, 128>}, {transform_indices = @transform_1, window_bounds = array<i64: 128, 128>}, {transform_indices = @transform_2, window_bounds = array<i64: 64, 128>}]} {
    %c0_i32 = arith.constant 0 : i32
    %0 = arith.cmpi eq, %arg2, %c0_i32 : i32
    %1 = arith.extui %0 : i1 to i32
    %c0_i32_0 = arith.constant 0 : i32
    %2 = arith.cmpi ne, %1, %c0_i32_0 : i32
    scf.if %2 {
      %cst_10 = arith.constant 0.000000e+00 : f32
      %12 = vector.broadcast %cst_10 : f32 to vector<64x128xf32>
      %c0_11 = arith.constant 0 : index
      %c0_12 = arith.constant 0 : index
      %13 = vector.load %arg6[%c0_11, %c0_12] : memref<64x128xf32, #tpu.memory_space<vmem>>, vector<64x128xf32>
      tpu.vector_store %arg6[%c0_11, %c0_12], %12 {strides = array<i32>} : memref<64x128xf32, #tpu.memory_space<vmem>>, vector<64x128xf32>,
    } else {
    }
    %c0 = arith.constant 0 : index
    %c0_1 = arith.constant 0 : index
    %3 = vector.load %arg6[%c0, %c0_1] : memref<64x128xf32, #tpu.memory_space<vmem>>, vector<64x128xf32>
    %c0_2 = arith.constant 0 : index
    %c0_3 = arith.constant 0 : index
    %4 = vector.load %arg3[%c0_2, %c0_3] : memref<64x128xf32, #tpu.memory_space<vmem>>, vector<64x128xf32>
    %c0_4 = arith.constant 0 : index
    %c0_5 = arith.constant 0 : index
    %5 = vector.load %arg4[%c0_4, %c0_5] : memref<128x128xf32, #tpu.memory_space<vmem>>, vector<128x128xf32>
    %cst = arith.constant dense<0.000000e+00> : vector<64x128xf32>
    %6 = tpu.matmul %4, %5, %cst {dimension_numbers = #tpu.dot_dimension_numbers<[1], [0], [0], [1], [0, 0, 1, 1], [], []>} : vector<64x128xf32>, vector<128x128xf32>, vector<64x128xf32> -> vector<64x128xf32>
    %7 = arith.addf %3, %6 : vector<64x128xf32>
    %c0_6 = arith.constant 0 : index
    %c0_7 = arith.constant 0 : index
    %8 = vector.load %arg6[%c0_6, %c0_7] : memref<64x128xf32, #tpu.memory_space<vmem>>, vector<64x128xf32>
    tpu.vector_store %arg6[%c0_6, %c0_7], %7 {strides = array<i32>} : memref<64x128xf32, #tpu.memory_space<vmem>>, vector<64x128xf32>,
    %c0_i32_8 = arith.constant 0 : i32
    %9 = arith.cmpi eq, %arg2, %c0_i32_8 : i32
    %10 = arith.extui %9 : i1 to i32
    %c0_i32_9 = arith.constant 0 : i32
    %11 = arith.cmpi ne, %10, %c0_i32_9 : i32
    scf.if %11 {
      %c0_10 = arith.constant 0 : index
      %c0_11 = arith.constant 0 : index
      %12 = vector.load %arg6[%c0_10, %c0_11] : memref<64x128xf32, #tpu.memory_space<vmem>>, vector<64x128xf32>
      %c0_12 = arith.constant 0 : index
      %c0_13 = arith.constant 0 : index
      %13 = vector.load %arg5[%c0_12, %c0_13] : memref<64x128xf32, #tpu.memory_space<vmem>>, vector<64x128xf32>
      tpu.vector_store %arg5[%c0_12, %c0_13], %12 {strides = array<i32>} : memref<64x128xf32, #tpu.memory_space<vmem>>, vector<64x128xf32>,
    } else {
    }
    return
  }
  func.func @transform_0(%arg0: i32, %arg1: i32, %arg2: i32) -> (i32, i32) {
    %c0_i32 = arith.constant 0 : i32
    return %arg0, %arg2 : i32, i32
  }
  func.func @transform_1(%arg0: i32, %arg1: i32, %arg2: i32) -> (i32, i32) {
    %c0_i32 = arith.constant 0 : i32
    return %arg2, %arg1 : i32, i32
  }
  func.func @transform_2(%arg0: i32, %arg1: i32, %arg2: i32) -> (i32, i32) {
    %c0_i32 = arith.constant 0 : i32
    return %arg0, %arg1 : i32, i32
  }
}

</mosaic_0001>

<llo_original>
// kernel: tpu_custom_call.1
$region0: #{tpu_custom_call.1}
  #allocation0 [shape = 'u32[]', space=smem, size = 0x4, offset = 0x4, fixed_abs, tag = 'smem constant byte address 0x4 - core index']
  #allocation1 [shape = 'u32[144,128]{1,0:T(1,128)}', space=vmem, size = 0x12000, scoped, tag = 'internal scratch']
  #allocation2 [shape = 'f32[64,128]{1,0:T(8,128)}', space=vmem, size = 0x8000, scoped, tag = 'scratch operand']
  %s0 = inlined_call_operand.hbm [shape: f32[64,128], index: 0, kind: input, shape index: {}]
  %s1 = inlined_call_operand.hbm [shape: f32[128,128], index: 1, kind: input, shape index: {}]
  %s2 = inlined_call_operand.hbm [shape: f32[64,128], index: 2, kind: output, shape index: {}]
  %s3 = sld [smem:[#allocation0]]
  $region34: #{tpu_custom_call.1} parent=0
    _
  %s5 = ssub.s32 1, %s3
  %s6 = scalar_select 0, %s5, %s3
  $region1: #{tpu_custom_call.1} parent=0
    #allocation3 [shape = 'u8[32768]{0}', space=vmem, size = 0x8000, scoped, tag = 'input window, operand 0, single buffered']
    #allocation4 [shape = 's32[1]{0}', space=sflag, size = 0x4, scoped, tag = 'scoped memory for tpu_custom_call.1']
    #allocation5 [shape = 's32[1]{0}', space=sflag, size = 0x4, scoped, tag = 'scoped memory for tpu_custom_call.1']
    #allocation6 [shape = 'u8[65536]{0}', space=vmem, size = 0x10000, scoped, tag = 'input window, operand 1, single buffered']
    #allocation7 [shape = 's32[1]{0}', space=sflag, size = 0x4, scoped, tag = 'scoped memory for tpu_custom_call.1']
    #allocation8 [shape = 'u8[32768]{0}', space=vmem, size = 0x8000, scoped, tag = 'output window, operand 0, single buffered']
    %7 = vsyncpa [#allocation4], 0
    %8 = vsyncpa [#allocation7], 0
    %9 = vsyncpa [#allocation5], 0
    // Predicated region
    $region2: #{tpu_custom_call.1} parent=1 // pred_check
      _
    $region3: #{tpu_custom_call.1} parent=1 // pred_check_branch
      %11 = sbr.rel (0) target = $region5
    $region4: #{tpu_custom_call.1} parent=1 // pred_region
      %s13 = ssub.s32 1024, 1024
      %14 = vsyncadd [#allocation4], %s13
      %s15 = sshll.u32 [#allocation3], 4
      %s16 = int_to_ptr.vmem [resolvable:$true] %s15
      %21 = dma.hbm_to_vmem [thread:$0]  %s0, 1024, %s16, [#allocation4], 128, 128, 8
    $region5: #{tpu_custom_call.1} parent=1 // pred_fallthru
      _
    // Predicated region
    $region6: #{tpu_custom_call.1} parent=1 // pred_check
      _
    $region7: #{tpu_custom_call.1} parent=1 // pred_check_branch
      %23 = sbr.rel (0) target = $region9
    $region8: #{tpu_custom_call.1} parent=1 // pred_region
      %s25 = ssub.s32 2048, 2048
      %26 = vsyncadd [#allocation7], %s25
      %s27 = sshll.u32 [#allocation6], 4
      %s28 = int_to_ptr.vmem [resolvable:$true] %s27
      %33 = dma.hbm_to_vmem [thread:$0]  %s1, 2048, %s28, [#allocation7], 128, 128, 8
    $region9: #{tpu_custom_call.1} parent=1 // pred_fallthru
      _
    // Predicated region
    $region10: #{tpu_custom_call.1} parent=1 // pred_check
      _
    $region11: #{tpu_custom_call.1} parent=1 // pred_check_branch
      %35 = sbr.rel (0) target = $region13
    $region12: #{tpu_custom_call.1} parent=1 // pred_region
      %36 = dma.done [#allocation4], 1024
    $region13: #{tpu_custom_call.1} parent=1 // pred_fallthru
      _
    // Predicated region
    $region14: #{tpu_custom_call.1} parent=1 // pred_check
      _
    $region15: #{tpu_custom_call.1} parent=1 // pred_check_branch
      %38 = sbr.rel (0) target = $region17
    $region16: #{tpu_custom_call.1} parent=1 // pred_region
      %39 = dma.done [#allocation7], 2048
    $region17: #{tpu_custom_call.1} parent=1 // pred_fallthru
      _
    %p40 = scmp.eq.s32.totalorder 0, 0
    // Predicated region
    $region18: #{tpu_custom_call.1} parent=1 // pred_check
      %p41 = pneg %p40
    $region19: #{tpu_custom_call.1} parent=1 // pred_check_branch
      %43 = sbr.rel (%p41) target = $region21
    $region20: #{tpu_custom_call.1} parent=1 // pred_region
      %44 = vst [vmem:[#allocation2] sm:$0xff] 0.0
      %45 = vst [vmem:[#allocation2 + $0x8] sm:$0xff] 0.0
      %46 = vst [vmem:[#allocation2 + $0x10] sm:$0xff] 0.0
      %47 = vst [vmem:[#allocation2 + $0x18] sm:$0xff] 0.0
      %48 = vst [vmem:[#allocation2 + $0x20] sm:$0xff] 0.0
      %49 = vst [vmem:[#allocation2 + $0x28] sm:$0xff] 0.0
      %50 = vst [vmem:[#allocation2 + $0x30] sm:$0xff] 0.0
      %51 = vst [vmem:[#allocation2 + $0x38] sm:$0xff] 0.0
    $region21: #{tpu_custom_call.1} parent=1 // pred_fallthru
      _
    %v52 = vld [vmem:[#allocation2] sm:$0xff]
    %v53 = vld [vmem:[#allocation2 + $0x8] sm:$0xff]
    %v54 = vld [vmem:[#allocation2 + $0x10] sm:$0xff]
    %v55 = vld [vmem:[#allocation2 + $0x18] sm:$0xff]
    %v56 = vld [vmem:[#allocation2 + $0x20] sm:$0xff]
    %v57 = vld [vmem:[#allocation2 + $0x28] sm:$0xff]
    %v58 = vld [vmem:[#allocation2 + $0x30] sm:$0xff]
    %v59 = vld [vmem:[#allocation2 + $0x38] sm:$0xff]
    %v60 = vld [vmem:[#allocation3] sm:$0xff]
    %v61 = vld [vmem:[#allocation3 + $0x8] sm:$0xff]
    %v62 = vld [vmem:[#allocation3 + $0x10] sm:$0xff]
    %v63 = vld [vmem:[#allocation3 + $0x18] sm:$0xff]
    %v64 = vld [vmem:[#allocation3 + $0x20] sm:$0xff]
    %v65 = vld [vmem:[#allocation3 + $0x28] sm:$0xff]
    %v66 = vld [vmem:[#allocation3 + $0x30] sm:$0xff]
    %v67 = vld [vmem:[#allocation3 + $0x38] sm:$0xff]
    %v68 = vld [vmem:[#allocation6] sm:$0xff]
    %v69 = vld [vmem:[#allocation6 + $0x8] sm:$0xff]
    %v70 = vld [vmem:[#allocation6 + $0x10] sm:$0xff]
    %v71 = vld [vmem:[#allocation6 + $0x18] sm:$0xff]
    %v72 = vld [vmem:[#allocation6 + $0x20] sm:$0xff]
    %v73 = vld [vmem:[#allocation6 + $0x28] sm:$0xff]
    %v74 = vld [vmem:[#allocation6 + $0x30] sm:$0xff]
    %v75 = vld [vmem:[#allocation6 + $0x38] sm:$0xff]
    %v76 = vld [vmem:[#allocation6 + $0x40] sm:$0xff]
    %v77 = vld [vmem:[#allocation6 + $0x48] sm:$0xff]
    %v78 = vld [vmem:[#allocation6 + $0x50] sm:$0xff]
    %v79 = vld [vmem:[#allocation6 + $0x58] sm:$0xff]
    %v80 = vld [vmem:[#allocation6 + $0x60] sm:$0xff]
    %v81 = vld [vmem:[#allocation6 + $0x68] sm:$0xff]
    %v82 = vld [vmem:[#allocation6 + $0x70] sm:$0xff]
    %v83 = vld [vmem:[#allocation6 + $0x78] sm:$0xff]
    %84 = vmatprep.subr.mxu0 0.0
    %85 = vmatpush1.msra.mxu0 %v68
    %86 = vmatprep.subr.mxu0 0.0
    %87 = vmatpush1.msra.mxu0 %v69
    %88 = vmatprep.subr.mxu0 0.0
    %89 = vmatpush1.msra.mxu0 %v70
    %90 = vmatprep.subr.mxu0 0.0
    %91 = vmatpush1.msra.mxu0 %v71
    %92 = vmatprep.subr.mxu0 0.0
    %93 = vmatpush1.msra.mxu0 %v72
    %94 = vmatprep.subr.mxu0 0.0
    %95 = vmatpush1.msra.mxu0 %v73
    %96 = vmatprep.subr.mxu0 0.0
    %97 = vmatpush1.msra.mxu0 %v74
    %98 = vmatprep.subr.mxu0 0.0
    %99 = vmatpush1.msra.mxu0 %v75
    %100 = vmatprep.subr.mxu0 0.0
    %101 = vmatpush1.msra.mxu0 %v76
    %102 = vmatprep.subr.mxu0 0.0
    %103 = vmatpush1.msra.mxu0 %v77
    %104 = vmatprep.subr.mxu0 0.0
    %105 = vmatpush1.msra.mxu0 %v78
    %106 = vmatprep.subr.mxu0 0.0
    %107 = vmatpush1.msra.mxu0 %v79
    %108 = vmatprep.subr.mxu0 0.0
    %109 = vmatpush1.msra.mxu0 %v80
    %110 = vmatprep.subr.mxu0 0.0
    %111 = vmatpush1.msra.mxu0 %v81
    %112 = vmatprep.subr.mxu0 0.0
    %113 = vmatpush1.msra.mxu0 %v82
    %114 = vmatprep.subr.mxu0 0.0
    %115 = vmatpush1.msra.mxu0 %v83
    %116 = vmatprep.subr.mxu0 0.0
    %117 = vmatpush1.msra.mxu0 0.0
    %118 = vmatprep.subr.mxu0 0.0
    %119 = vmatpush1.msra.mxu0 0.0
    %120 = vmatprep.subr.mxu0 0.0
    %121 = vmatpush1.msra.mxu0 0.0
    %122 = vmatprep.subr.mxu0 0.0
    %123 = vmatpush1.msra.mxu0 0.0
    %124 = vmatprep.subr.mxu0 0.0
    %125 = vmatpush1.msra.mxu0 0.0
    %126 = vmatprep.subr.mxu0 0.0
    %127 = vmatpush1.msra.mxu0 0.0
    %128 = vmatprep.subr.mxu0 0.0
    %129 = vmatpush1.msra.mxu0 0.0
    %130 = vmatprep.subr.mxu0 0.0
    %131 = vmatpush1.msra.mxu0 0.0
    %132 = vmatprep.subr.mxu0 0.0
    %133 = vmatpush1.msra.mxu0 0.0
    %134 = vmatprep.subr.mxu0 0.0
    %135 = vmatpush1.msra.mxu0 0.0
    %136 = vmatprep.subr.mxu0 0.0
    %137 = vmatpush1.msra.mxu0 0.0
    %138 = vmatprep.subr.mxu0 0.0
    %139 = vmatpush1.msra.mxu0 0.0
    %140 = vmatprep.subr.mxu0 0.0
    %141 = vmatpush1.msra.mxu0 0.0
    %142 = vmatprep.subr.mxu0 0.0
    %143 = vmatpush1.msra.mxu0 0.0
    %144 = vmatprep.subr.mxu0 0.0
    %145 = vmatpush1.msra.mxu0 0.0
    %146 = vmatprep.subr.mxu0 0.0
    %147 = vmatpush1.msra.mxu0 0.0
    %148 = vmatprep.mubr.f32.mxu0 0.0
    %149 = vmatmul.mubr.f32.gmra.mrb[0].mxu0 %v60
    %v150 = vpop.f32.mrb[0].mxu0
    %v151 = vadd.f32 0.0, %v150
    %v152 = vpop.f32.mrb[0].mxu0
    %153 = vmatprep.mubr.f32.mxu0 0.0
    %154 = vmatmul.mubr.f32.gmra.mrb[0].mxu0 %v61
    %v155 = vpop.f32.mrb[0].mxu0
    %v156 = vadd.f32 0.0, %v155
    %v157 = vpop.f32.mrb[0].mxu0
    %158 = vmatprep.mubr.f32.mxu0 0.0
    %159 = vmatmul.mubr.f32.gmra.mrb[0].mxu0 %v62
    %v160 = vpop.f32.mrb[0].mxu0
    %v161 = vadd.f32 0.0, %v160
    %v162 = vpop.f32.mrb[0].mxu0
    %163 = vmatprep.mubr.f32.mxu0 0.0
    %164 = vmatmul.mubr.f32.gmra.mrb[0].mxu0 %v63
    %v165 = vpop.f32.mrb[0].mxu0
    %v166 = vadd.f32 0.0, %v165
    %v167 = vpop.f32.mrb[0].mxu0
    %168 = vmatprep.mubr.f32.mxu0 0.0
    %169 = vmatmul.mubr.f32.gmra.mrb[0].mxu0 %v64
    %v170 = vpop.f32.mrb[0].mxu0
    %v171 = vadd.f32 0.0, %v170
    %v172 = vpop.f32.mrb[0].mxu0
    %173 = vmatprep.mubr.f32.mxu0 0.0
    %174 = vmatmul.mubr.f32.gmra.mrb[0].mxu0 %v65
    %v175 = vpop.f32.mrb[0].mxu0
    %v176 = vadd.f32 0.0, %v175
    %v177 = vpop.f32.mrb[0].mxu0
    %178 = vmatprep.mubr.f32.mxu0 0.0
    %179 = vmatmul.mubr.f32.gmra.mrb[0].mxu0 %v66
    %v180 = vpop.f32.mrb[0].mxu0
    %v181 = vadd.f32 0.0, %v180
    %v182 = vpop.f32.mrb[0].mxu0
    %183 = vmatprep.mubr.f32.mxu0 0.0
    %184 = vmatmul.mubr.f32.gmra.mrb[0].mxu0 %v67
    %v185 = vpop.f32.mrb[0].mxu0
    %v186 = vadd.f32 0.0, %v185
    %v187 = vpop.f32.mrb[0].mxu0
    %188 = vdwg.mxu0
    %v189 = vadd.f32 %v52, %v151
    %v190 = vadd.f32 %v53, %v156
    %v191 = vadd.f32 %v54, %v161
    %v192 = vadd.f32 %v55, %v166
    %v193 = vadd.f32 %v56, %v171
    %v194 = vadd.f32 %v57, %v176
    %v195 = vadd.f32 %v58, %v181
    %v196 = vadd.f32 %v59, %v186
    %197 = vst [vmem:[#allocation2] sm:$0xff] %v189
    %198 = vst [vmem:[#allocation2 + $0x8] sm:$0xff] %v190
    %199 = vst [vmem:[#allocation2 + $0x10] sm:$0xff] %v191
    %200 = vst [vmem:[#allocation2 + $0x18] sm:$0xff] %v192
    %201 = vst [vmem:[#allocation2 + $0x20] sm:$0xff] %v193
    %202 = vst [vmem:[#allocation2 + $0x28] sm:$0xff] %v194
    %203 = vst [vmem:[#allocation2 + $0x30] sm:$0xff] %v195
    %204 = vst [vmem:[#allocation2 + $0x38] sm:$0xff] %v196
    // Predicated region
    $region22: #{tpu_custom_call.1} parent=1 // pred_check
      %p205 = pneg %p40
    $region23: #{tpu_custom_call.1} parent=1 // pred_check_branch
      %207 = sbr.rel (%p205) target = $region25
    $region24: #{tpu_custom_call.1} parent=1 // pred_region
      %v208 = vld [vmem:[#allocation2] sm:$0xff]
      %v209 = vld [vmem:[#allocation2 + $0x8] sm:$0xff]
      %v210 = vld [vmem:[#allocation2 + $0x10] sm:$0xff]
      %v211 = vld [vmem:[#allocation2 + $0x18] sm:$0xff]
      %v212 = vld [vmem:[#allocation2 + $0x20] sm:$0xff]
      %v213 = vld [vmem:[#allocation2 + $0x28] sm:$0xff]
      %v214 = vld [vmem:[#allocation2 + $0x30] sm:$0xff]
      %v215 = vld [vmem:[#allocation2 + $0x38] sm:$0xff]
      %216 = vst [vmem:[#allocation8] sm:$0xff] %v208
      %217 = vst [vmem:[#allocation8 + $0x8] sm:$0xff] %v209
      %218 = vst [vmem:[#allocation8 + $0x10] sm:$0xff] %v210
      %219 = vst [vmem:[#allocation8 + $0x18] sm:$0xff] %v211
      %220 = vst [vmem:[#allocation8 + $0x20] sm:$0xff] %v212
      %221 = vst [vmem:[#allocation8 + $0x28] sm:$0xff] %v213
      %222 = vst [vmem:[#allocation8 + $0x30] sm:$0xff] %v214
      %223 = vst [vmem:[#allocation8 + $0x38] sm:$0xff] %v215
    $region25: #{tpu_custom_call.1} parent=1 // pred_fallthru
      _
    // Predicated region
    $region26: #{tpu_custom_call.1} parent=1 // pred_check
      _
    $region27: #{tpu_custom_call.1} parent=1 // pred_check_branch
      %225 = sbr.rel (0) target = $region29
    $region28: #{tpu_custom_call.1} parent=1 // pred_region
      %s227 = ssub.s32 1024, 1024
      %228 = vsyncadd [#allocation5], %s227
      %s229 = sshll.u32 [#allocation8], 4
      %s230 = int_to_ptr.vmem [resolvable:$true] %s229
      %235 = dma.vmem_to_hbm [thread:$0]  %s230, 1024, %s2, [#allocation5], 128, 128, 8
    $region29: #{tpu_custom_call.1} parent=1 // pred_fallthru
      _
    // Predicated region
    $region30: #{tpu_custom_call.1} parent=1 // pred_check
      _
    $region31: #{tpu_custom_call.1} parent=1 // pred_check_branch
      %237 = sbr.rel (0) target = $region33
    $region32: #{tpu_custom_call.1} parent=1 // pred_region
      %238 = dma.done [#allocation5], 1024
    $region33: #{tpu_custom_call.1} parent=1 // pred_fallthru
      _
    %239 = vsyncpa [#allocation4], 1
    %240 = vsyncpa [#allocation7], 1
    %241 = vsyncpa [#allocation5], 1

</llo_original>
